<compile_context>
chip_gen: v7x
topology: tpu7x:2x2x1
jax: 0.10.0
libtpu: 0.0.40
codegen_flags: <defaults>
</compile_context>

<pallas_src>
import functools

import jax
import jax.numpy as jnp
from jax.experimental import pallas as pl
from jax.experimental.pallas import tpu as pltpu

_LANE = 128


def _round_up(n, m):
    return ((n + m - 1) // m) * m


def _mlp_kernel(x_ref,
                w1_ref, b1_ref,
                w2_ref, b2_ref,
                w3_ref, b3_ref,
                w4_ref, b4_ref,
                o_ref):
    # All matmuls: bf16 operands, f32 accumulation on the MXU; tanh on the EUP.
    h = jnp.dot(x_ref[...], w1_ref[...],
                preferred_element_type=jnp.float32) + b1_ref[...]
    h = jnp.tanh(h).astype(jnp.bfloat16)
    h = jnp.dot(h, w2_ref[...],
                preferred_element_type=jnp.float32) + b2_ref[...]
    h = jnp.tanh(h).astype(jnp.bfloat16)
    h = jnp.dot(h, w3_ref[...],
                preferred_element_type=jnp.float32) + b3_ref[...]
    h = jnp.tanh(h).astype(jnp.bfloat16)
    out = jnp.dot(h, w4_ref[...],
                  preferred_element_type=jnp.float32) + b4_ref[...]
    o_ref[...] = out.astype(o_ref.dtype)


def prepare_params(params):
    """One-time prep (off the hot path): transpose PyTorch (out,in) -> (in,out),
    zero-pad every dim to a multiple of 128, cast matmul operands to bf16.
    Biases stay f32 (added after the f32-accumulated dot)."""
    prepared = []
    for i in (1, 2, 3, 4):
        w = jnp.asarray(params[f"w{i}"], jnp.float32).T        # (in, out)
        b = jnp.asarray(params[f"b{i}"], jnp.float32)
        fin, fout = w.shape
        fin_p, fout_p = _round_up(fin, _LANE), _round_up(fout, _LANE)
        w_p = jnp.zeros((fin_p, fout_p), jnp.float32).at[:fin, :fout].set(w)
        b_p = jnp.zeros((1, fout_p), jnp.float32).at[0, :fout].set(b)
        prepared.append((w_p.astype(jnp.bfloat16), b_p))
    return tuple(prepared)


@functools.partial(jax.jit, static_argnames=("out_dim", "block_batch"))
def mlp_regression_forward(x, prepared, out_dim, *, block_batch=512):
    """x: (batch, input_dim) float32.  prepared: output of prepare_params()."""
    batch, in_dim = x.shape
    in_pad = prepared[0][0].shape[0]
    out_pad = prepared[-1][0].shape[1]

    # Batch tile: big tiles amortize the ~0.35us/step overhead; clamp for tiny batches.
    tb = int(min(block_batch, _round_up(batch, 8)))
    batch_pad = _round_up(batch, tb)

    # Pad batch rows + feature lanes with zeros; cast operand to bf16.
    x_p = jnp.zeros((batch_pad, in_pad), jnp.bfloat16)
    x_p = x_p.at[:batch, :in_dim].set(x.astype(jnp.bfloat16))

    args = [x_p]
    in_specs = [pl.BlockSpec((tb, in_pad), lambda i: (i, 0))]
    for w, b in prepared:
        args += [w, b]
        # Constant index_map -> weights/biases stay resident in VMEM across the grid.
        in_specs += [
            pl.BlockSpec(w.shape, lambda i: (0, 0)),
            pl.BlockSpec(b.shape, lambda i: (0, 0)),
        ]
    out_specs = pl.BlockSpec((tb, out_pad), lambda i: (i, 0))

    # Explicit VMEM budget derived from the tile sizes (tiny here; cap well below
    # v7x's 64 MiB physical VMEM so the same code is safe on every generation).
    tile_bytes = 2 * (tb * in_pad * 2) + 2 * (tb * out_pad * 4)          # x + out, dbl-buffered
    w_bytes = 2 * sum(int(w.size) * 2 + int(b.size) * 4 for w, b in prepared)
    act_bytes = 4 * tb * max(int(w.shape[1]) for w, _ in prepared) * 4   # intermediates
    vmem_limit = int(min(48 << 20, tile_bytes + w_bytes + act_bytes + (4 << 20)))

    out = pl.pallas_call(
        _mlp_kernel,
        grid=(batch_pad // tb,),
        out_shape=jax.ShapeDtypeStruct((batch_pad, out_pad), jnp.float32),
        in_specs=in_specs,
        out_specs=out_specs,
        compiler_params=pltpu.CompilerParams(
            dimension_semantics=("parallel",),
            vmem_limit_bytes=vmem_limit,
        ),
    )(*args)
    return out[:batch, :out_dim]


def init_params(key, input_dim, output_dim, h1, h2, h3):
    """Deterministic PyTorch-Linear-style init: U(-1/sqrt(fan_in), 1/sqrt(fan_in))."""
    dims = [(input_dim, h1), (h1, h2), (h2, h3), (h3, output_dim)]
    params = {}
    for i, (fan_in, fan_out) in enumerate(dims, start=1):
        key, kw, kb = jax.random.split(key, 3)
        bound = 1.0 / jnp.sqrt(jnp.float32(fan_in))
        params[f"w{i}"] = jax.random.uniform(
            kw, (fan_out, fan_in), jnp.float32, -bound, bound)
        params[f"b{i}"] = jax.random.uniform(
            kb, (fan_out,), jnp.float32, -bound, bound)
    return params


def _reference_forward_bf16(x, params):
    """Numerics-matched reference: bf16 operands, f32 accumulation, f32 bias/tanh."""
    h = x
    for i in (1, 2, 3, 4):
        w = params[f"w{i}"].T
        z = jnp.dot(h.astype(jnp.bfloat16), w.astype(jnp.bfloat16),
                    preferred_element_type=jnp.float32) + params[f"b{i}"]
        h = jnp.tanh(z) if i < 4 else z
    return h


def _reference_forward_f32(x, params):
    h = x
    for i in (1, 2, 3):
        h = jnp.tanh(h @ params[f"w{i}"].T + params[f"b{i}"])
    return h @ params["w4"].T + params["b4"]


if __name__ == "__main__":
    # Small shapes consistent with MLPRegression(input_dim, output_dim, h1, h2, h3).
    # batch=40 with block_batch=16 exercises the batch grid (3 steps) and row padding.
    batch, input_dim, output_dim = 40, 16, 4
    h1, h2, h3 = 32, 64, 32

    key = jax.random.PRNGKey(0)
    key, kx = jax.random.split(key)
    x = jax.random.normal(kx, (batch, input_dim), jnp.float32)
    params = init_params(key, input_dim, output_dim, h1, h2, h3)

    prepared = prepare_params(params)                      # one-time, off the hot path
    out = mlp_regression_forward(x, prepared, output_dim, block_batch=16)
    out = jax.block_until_ready(out)

    ref_bf16 = _reference_forward_bf16(x, params)
    ref_f32 = _reference_forward_f32(x, params)

    assert out.shape == (batch, output_dim)
    assert jnp.allclose(out, ref_bf16, atol=5e-3, rtol=5e-3)
    assert jnp.allclose(out, ref_f32, atol=5e-2, rtol=5e-2)

    print("KERNEL_OK")
</pallas_src>

<mosaic_0001>
module attributes {stable_mosaic.version = 11 : i64} {
  func.func @_mlp_kernel(%arg0: i32, %arg1: memref<16x128xbf16, #tpu.memory_space<vmem>>, %arg2: memref<128x128xbf16, #tpu.memory_space<vmem>>, %arg3: memref<1x128xf32, #tpu.memory_space<vmem>>, %arg4: memref<128x128xbf16, #tpu.memory_space<vmem>>, %arg5: memref<1x128xf32, #tpu.memory_space<vmem>>, %arg6: memref<128x128xbf16, #tpu.memory_space<vmem>>, %arg7: memref<1x128xf32, #tpu.memory_space<vmem>>, %arg8: memref<128x128xbf16, #tpu.memory_space<vmem>>, %arg9: memref<1x128xf32, #tpu.memory_space<vmem>>, %arg10: memref<16x128xf32, #tpu.memory_space<vmem>>) attributes {dimension_semantics = [#tpu.dimension_semantics<parallel>], iteration_bounds = array<i64: 3>, scalar_prefetch = 0 : i64, scratch_operands = 0 : i64, tpu.core_type = #tpu.core_type<tc>, window_params = [{transform_indices = @transform_0, window_bounds = array<i64: 16, 128>}, {pipeline_mode = #tpu.pipeline_mode<synchronous>, transform_indices = @transform_1, window_bounds = array<i64: 128, 128>}, {pipeline_mode = #tpu.pipeline_mode<synchronous>, transform_indices = @transform_2, window_bounds = array<i64: 1, 128>}, {pipeline_mode = #tpu.pipeline_mode<synchronous>, transform_indices = @transform_3, window_bounds = array<i64: 128, 128>}, {pipeline_mode = #tpu.pipeline_mode<synchronous>, transform_indices = @transform_4, window_bounds = array<i64: 1, 128>}, {pipeline_mode = #tpu.pipeline_mode<synchronous>, transform_indices = @transform_5, window_bounds = array<i64: 128, 128>}, {pipeline_mode = #tpu.pipeline_mode<synchronous>, transform_indices = @transform_6, window_bounds = array<i64: 1, 128>}, {pipeline_mode = #tpu.pipeline_mode<synchronous>, transform_indices = @transform_7, window_bounds = array<i64: 128, 128>}, {pipeline_mode = #tpu.pipeline_mode<synchronous>, transform_indices = @transform_8, window_bounds = array<i64: 1, 128>}, {transform_indices = @transform_9, window_bounds = array<i64: 16, 128>}]} {
    %c0 = arith.constant 0 : index
    %c0_0 = arith.constant 0 : index
    %0 = vector.load %arg1[%c0, %c0_0] : memref<16x128xbf16, #tpu.memory_space<vmem>>, vector<16x128xbf16>
    %c0_1 = arith.constant 0 : index
    %c0_2 = arith.constant 0 : index
    %1 = vector.load %arg2[%c0_1, %c0_2] : memref<128x128xbf16, #tpu.memory_space<vmem>>, vector<128x128xbf16>
    %cst = arith.constant dense<0.000000e+00> : vector<16x128xf32>
    %2 = tpu.matmul %0, %1, %cst {dimension_numbers = #tpu.dot_dimension_numbers<[1], [0], [0], [1], [0, 0, 1, 1], [], []>} : vector<16x128xbf16>, vector<128x128xbf16>, vector<16x128xf32> -> vector<16x128xf32>
    %c0_3 = arith.constant 0 : index
    %c0_4 = arith.constant 0 : index
    %3 = vector.load %arg3[%c0_3, %c0_4] : memref<1x128xf32, #tpu.memory_space<vmem>>, vector<1x128xf32>
    %4 = vector.broadcast %3 : vector<1x128xf32> to vector<16x128xf32>
    %5 = arith.addf %2, %4 : vector<16x128xf32>
    %6 = math.tanh %5 : vector<16x128xf32>
    %7 = arith.truncf %6 : vector<16x128xf32> to vector<16x128xbf16>
    %c0_5 = arith.constant 0 : index
    %c0_6 = arith.constant 0 : index
    %8 = vector.load %arg4[%c0_5, %c0_6] : memref<128x128xbf16, #tpu.memory_space<vmem>>, vector<128x128xbf16>
    %cst_7 = arith.constant dense<0.000000e+00> : vector<16x128xf32>
    %9 = tpu.matmul %7, %8, %cst_7 {dimension_numbers = #tpu.dot_dimension_numbers<[1], [0], [0], [1], [0, 0, 1, 1], [], []>} : vector<16x128xbf16>, vector<128x128xbf16>, vector<16x128xf32> -> vector<16x128xf32>
    %c0_8 = arith.constant 0 : index
    %c0_9 = arith.constant 0 : index
    %10 = vector.load %arg5[%c0_8, %c0_9] : memref<1x128xf32, #tpu.memory_space<vmem>>, vector<1x128xf32>
    %11 = vector.broadcast %10 : vector<1x128xf32> to vector<16x128xf32>
    %12 = arith.addf %9, %11 : vector<16x128xf32>
    %13 = math.tanh %12 : vector<16x128xf32>
    %14 = arith.truncf %13 : vector<16x128xf32> to vector<16x128xbf16>
    %c0_10 = arith.constant 0 : index
    %c0_11 = arith.constant 0 : index
    %15 = vector.load %arg6[%c0_10, %c0_11] : memref<128x128xbf16, #tpu.memory_space<vmem>>, vector<128x128xbf16>
    %cst_12 = arith.constant dense<0.000000e+00> : vector<16x128xf32>
    %16 = tpu.matmul %14, %15, %cst_12 {dimension_numbers = #tpu.dot_dimension_numbers<[1], [0], [0], [1], [0, 0, 1, 1], [], []>} : vector<16x128xbf16>, vector<128x128xbf16>, vector<16x128xf32> -> vector<16x128xf32>
    %c0_13 = arith.constant 0 : index
    %c0_14 = arith.constant 0 : index
    %17 = vector.load %arg7[%c0_13, %c0_14] : memref<1x128xf32, #tpu.memory_space<vmem>>, vector<1x128xf32>
    %18 = vector.broadcast %17 : vector<1x128xf32> to vector<16x128xf32>
    %19 = arith.addf %16, %18 : vector<16x128xf32>
    %20 = math.tanh %19 : vector<16x128xf32>
    %21 = arith.truncf %20 : vector<16x128xf32> to vector<16x128xbf16>
    %c0_15 = arith.constant 0 : index
    %c0_16 = arith.constant 0 : index
    %22 = vector.load %arg8[%c0_15, %c0_16] : memref<128x128xbf16, #tpu.memory_space<vmem>>, vector<128x128xbf16>
    %cst_17 = arith.constant dense<0.000000e+00> : vector<16x128xf32>
    %23 = tpu.matmul %21, %22, %cst_17 {dimension_numbers = #tpu.dot_dimension_numbers<[1], [0], [0], [1], [0, 0, 1, 1], [], []>} : vector<16x128xbf16>, vector<128x128xbf16>, vector<16x128xf32> -> vector<16x128xf32>
    %c0_18 = arith.constant 0 : index
    %c0_19 = arith.constant 0 : index
    %24 = vector.load %arg9[%c0_18, %c0_19] : memref<1x128xf32, #tpu.memory_space<vmem>>, vector<1x128xf32>
    %25 = vector.broadcast %24 : vector<1x128xf32> to vector<16x128xf32>
    %26 = arith.addf %23, %25 : vector<16x128xf32>
    %c0_20 = arith.constant 0 : index
    %c0_21 = arith.constant 0 : index
    %27 = vector.load %arg10[%c0_20, %c0_21] : memref<16x128xf32, #tpu.memory_space<vmem>>, vector<16x128xf32>
    tpu.vector_store %arg10[%c0_20, %c0_21], %26 {strides = array<i32>} : memref<16x128xf32, #tpu.memory_space<vmem>>, vector<16x128xf32>,
    return
  }
  func.func @transform_0(%arg0: i32) -> (i32, i32) {
    %c0_i32 = arith.constant 0 : i32
    %c0_i32_0 = arith.constant 0 : i32
    return %arg0, %c0_i32 : i32, i32
  }
  func.func @transform_1(%arg0: i32) -> (i32, i32) {
    %c0_i32 = arith.constant 0 : i32
    %c0_i32_0 = arith.constant 0 : i32
    %c0_i32_1 = arith.constant 0 : i32
    return %c0_i32, %c0_i32_0 : i32, i32
  }
  func.func @transform_2(%arg0: i32) -> (i32, i32) {
    %c0_i32 = arith.constant 0 : i32
    %c0_i32_0 = arith.constant 0 : i32
    %c0_i32_1 = arith.constant 0 : i32
    return %c0_i32, %c0_i32_0 : i32, i32
  }
  func.func @transform_3(%arg0: i32) -> (i32, i32) {
    %c0_i32 = arith.constant 0 : i32
    %c0_i32_0 = arith.constant 0 : i32
    %c0_i32_1 = arith.constant 0 : i32
    return %c0_i32, %c0_i32_0 : i32, i32
  }
  func.func @transform_4(%arg0: i32) -> (i32, i32) {
    %c0_i32 = arith.constant 0 : i32
    %c0_i32_0 = arith.constant 0 : i32
    %c0_i32_1 = arith.constant 0 : i32
    return %c0_i32, %c0_i32_0 : i32, i32
  }
  func.func @transform_5(%arg0: i32) -> (i32, i32) {
    %c0_i32 = arith.constant 0 : i32
    %c0_i32_0 = arith.constant 0 : i32
    %c0_i32_1 = arith.constant 0 : i32
    return %c0_i32, %c0_i32_0 : i32, i32
  }
  func.func @transform_6(%arg0: i32) -> (i32, i32) {
    %c0_i32 = arith.constant 0 : i32
    %c0_i32_0 = arith.constant 0 : i32
    %c0_i32_1 = arith.constant 0 : i32
    return %c0_i32, %c0_i32_0 : i32, i32
  }
  func.func @transform_7(%arg0: i32) -> (i32, i32) {
    %c0_i32 = arith.constant 0 : i32
    %c0_i32_0 = arith.constant 0 : i32
    %c0_i32_1 = arith.constant 0 : i32
    return %c0_i32, %c0_i32_0 : i32, i32
  }
  func.func @transform_8(%arg0: i32) -> (i32, i32) {
    %c0_i32 = arith.constant 0 : i32
    %c0_i32_0 = arith.constant 0 : i32
    %c0_i32_1 = arith.constant 0 : i32
    return %c0_i32, %c0_i32_0 : i32, i32
  }
  func.func @transform_9(%arg0: i32) -> (i32, i32) {
    %c0_i32 = arith.constant 0 : i32
    %c0_i32_0 = arith.constant 0 : i32
    return %arg0, %c0_i32 : i32, i32
  }
}

</mosaic_0001>

<llo_original>
// kernel: mlp_regression_forward.1
$region0: #{mlp_regression_forward.1}
  #allocation0 [shape = 'u32[]', space=smem, size = 0x4, offset = 0x4, fixed_abs, tag = 'smem constant byte address 0x4 - core index']
  #allocation1 [shape = 'u32[144,128]{1,0:T(1,128)}', space=vmem, size = 0x12000, scoped, tag = 'internal scratch']
  %s0 = inlined_call_operand.vmem [shape: bf16[48,128], index: 0, kind: input, shape index: {}]
  %s1 = inlined_call_operand.vmem [shape: bf16[128,128], index: 1, kind: input, shape index: {}]
  %s2 = inlined_call_operand.vmem [shape: f32[1,128], index: 2, kind: input, shape index: {}]
  %s3 = inlined_call_operand.hbm [shape: bf16[128,128], index: 3, kind: input, shape index: {}]
  %s4 = inlined_call_operand.vmem [shape: f32[1,128], index: 4, kind: input, shape index: {}]
  %s5 = inlined_call_operand.hbm [shape: bf16[128,128], index: 5, kind: input, shape index: {}]
  %s6 = inlined_call_operand.vmem [shape: f32[1,128], index: 6, kind: input, shape index: {}]
  %s7 = inlined_call_operand.hbm [shape: bf16[128,128], index: 7, kind: input, shape index: {}]
  %s8 = inlined_call_operand.vmem [shape: f32[1,128], index: 8, kind: input, shape index: {}]
  %s9 = inlined_call_operand.vmem [shape: f32[48,128], index: 9, kind: output, shape index: {}]
  %s10 = sld [smem:[#allocation0]]
  $region81: #{mlp_regression_forward.1} parent=0
    _
  %s12 = ssub.s32 1, %s10
  %s13 = scalar_select 0, %s12, %s10
  $region1: #{mlp_regression_forward.1} parent=0
    #allocation2 [shape = 'u8[32768]{0}', space=vmem, size = 0x8000, scoped, tag = 'input window, operand 3, single buffered']
    #allocation3 [shape = 's32[2]{0}', space=sflag, size = 0x8, scoped, tag = 'scoped memory for mlp_regression_forward.1']
    #allocation4 [shape = 'u8[32768]{0}', space=vmem, size = 0x8000, scoped, tag = 'input window, operand 5, single buffered']
    #allocation5 [shape = 's32[1]{0}', space=sflag, size = 0x4, scoped, tag = 'scoped memory for mlp_regression_forward.1']
    #allocation6 [shape = 'u8[32768]{0}', space=vmem, size = 0x8000, scoped, tag = 'input window, operand 7, single buffered']
    %14 = vsyncpa [#allocation3], 0
    %15 = vsyncpa [#allocation5], 0
    loop: start=0, step=1, limit=5
    $region2: #{mlp_regression_forward.1} parent=1 // loop_pre_header
      _
    $region3: #{mlp_regression_forward.1} parent=1 // loop_header
      %s17 = sphi 0, %s21
      %p18 = scmp.ge.s32.totalorder %s17, 5
      %s27 = sphi 0, %s29
      %s30 = sphi 0, %s27
      %s31 = sphi 0, %s30
      %s47 = sphi 0, %s31
      %s51 = sphi 0, %s51
      %s53 = sphi 0, %s51
      %s54 = sphi 0, %s53
      %s68 = sphi 0, %s54
      %s72 = sphi 0, %s72
      %s74 = sphi 0, %s72
      %s75 = sphi 0, %s74
      %s89 = sphi 0, %s75
      %s93 = sphi 0, %s93
      %s95 = sphi 0, %s93
      %s96 = sphi 0, %s95
      %s110 = sphi 0, %s96
      %s114 = sphi 0, %s114
      %s116 = sphi 0, %s114
      %s117 = sphi 0, %s116
      %s131 = sphi 0, %s117
      %s135 = sphi 0, %s135
      %s137 = sphi 0, %s135
      %s138 = sphi 0, %s137
      %s152 = sphi 0, %s138
      %s156 = sphi 0, %s156
      %s158 = sphi 0, %s156
      %s159 = sphi 0, %s158
      %s173 = sphi 0, %s159
      %s177 = sphi 0, %s177
      %s179 = sphi 0, %s177
      %s180 = sphi 0, %s179
      %s194 = sphi 0, %s180
      %s198 = sphi 0, %s198
      %s200 = sphi 0, %s198
      %s201 = sphi 0, %s200
      %s215 = sphi 0, %s201
      %s221 = sphi 0, %s223
      %s224 = sphi 0, %s221
      %s225 = sphi 0, %s224
      %s241 = sphi 0, %s225
    $region4: #{mlp_regression_forward.1} parent=1 // loop_header_branch
      %20 = sbr.rel (%p18) target = $region8
    $region5: #{mlp_regression_forward.1} parent=1 // loop_body
      %s22 = ssub.s32 %s17, 1
      %s23 = ssub.s32 %s17, 2
      %s24 = sadd.s32 %s17, 1
      %s25 = ssub.s32 %s17, %s24
      %p26 = scmp.eq.s32.totalorder %s25, 0
      %s28 = sadd.s32 %s27, 1
      %s29 = scalar_select %p26, %s27, %s28
      %p32 = pneg %p26
      %p33 = scmp.eq.s32.totalorder %s17, 2
      %p34 = por %p32, %p33
      %p35 = scmp.ne.s32.totalorder %s27, %s30
      %p36 = scmp.eq.s32.totalorder %s17, 0
      %p37 = por %p35, %p36
      %p38 = scmp.ne.s32.totalorder %s27, %s30
      %p39 = scmp.eq.s32.totalorder %s22, 2
      %p40 = por %p38, %p39
      %p41 = scmp.ne.s32.totalorder %s30, %s31
      %p42 = scmp.eq.s32.totalorder %s22, 0
      %p43 = por %p41, %p42
      %p44 = scmp.ne.s32.totalorder %s30, %s31
      %p45 = scmp.eq.s32.totalorder %s23, 2
      %p46 = por %p44, %p45
      %p48 = scmp.ne.s32.totalorder %s31, %s47
      %p49 = scmp.eq.s32.totalorder %s23, 0
      %p50 = por %p48, %p49
      %s52 = sadd.s32 %s51, 1
      %p55 = scmp.eq.s32.totalorder %s17, 2
      %p56 = scmp.ne.s32.totalorder %s51, %s53
      %p57 = scmp.eq.s32.totalorder %s17, 0
      %p58 = por %p56, %p57
      %p59 = scmp.ne.s32.totalorder %s51, %s53
      %p60 = scmp.eq.s32.totalorder %s22, 2
      %p61 = por %p59, %p60
      %p62 = scmp.ne.s32.totalorder %s53, %s54
      %p63 = scmp.eq.s32.totalorder %s22, 0
      %p64 = por %p62, %p63
      %p65 = scmp.ne.s32.totalorder %s53, %s54
      %p66 = scmp.eq.s32.totalorder %s23, 2
      %p67 = por %p65, %p66
      %p69 = scmp.ne.s32.totalorder %s54, %s68
      %p70 = scmp.eq.s32.totalorder %s23, 0
      %p71 = por %p69, %p70
      %s73 = sadd.s32 %s72, 1
      %p76 = scmp.eq.s32.totalorder %s17, 2
      %p77 = scmp.ne.s32.totalorder %s72, %s74
      %p78 = scmp.eq.s32.totalorder %s17, 0
      %p79 = por %p77, %p78
      %p80 = scmp.ne.s32.totalorder %s72, %s74
      %p81 = scmp.eq.s32.totalorder %s22, 2
      %p82 = por %p80, %p81
      %p83 = scmp.ne.s32.totalorder %s74, %s75
      %p84 = scmp.eq.s32.totalorder %s22, 0
      %p85 = por %p83, %p84
      %p86 = scmp.ne.s32.totalorder %s74, %s75
      %p87 = scmp.eq.s32.totalorder %s23, 2
      %p88 = por %p86, %p87
      %p90 = scmp.ne.s32.totalorder %s75, %s89
      %p91 = scmp.eq.s32.totalorder %s23, 0
      %p92 = por %p90, %p91
      %s94 = sadd.s32 %s93, 1
      %p97 = scmp.eq.s32.totalorder %s17, 2
      %p98 = scmp.ne.s32.totalorder %s93, %s95
      %p99 = scmp.eq.s32.totalorder %s17, 0
      %p100 = por %p98, %p99
      %p101 = scmp.ne.s32.totalorder %s93, %s95
      %p102 = scmp.eq.s32.totalorder %s22, 2
      %p103 = por %p101, %p102
      %p104 = scmp.ne.s32.totalorder %s95, %s96
      %p105 = scmp.eq.s32.totalorder %s22, 0
      %p106 = por %p104, %p105
      %p107 = scmp.ne.s32.totalorder %s95, %s96
      %p108 = scmp.eq.s32.totalorder %s23, 2
      %p109 = por %p107, %p108
      %p111 = scmp.ne.s32.totalorder %s96, %s110
      %p112 = scmp.eq.s32.totalorder %s23, 0
      %p113 = por %p111, %p112
      %s115 = sadd.s32 %s114, 1
      %p118 = scmp.eq.s32.totalorder %s17, 2
      %p119 = scmp.ne.s32.totalorder %s114, %s116
      %p120 = scmp.eq.s32.totalorder %s17, 0
      %p121 = por %p119, %p120
      %p122 = scmp.ne.s32.totalorder %s114, %s116
      %p123 = scmp.eq.s32.totalorder %s22, 2
      %p124 = por %p122, %p123
      %p125 = scmp.ne.s32.totalorder %s116, %s117
      %p126 = scmp.eq.s32.totalorder %s22, 0
      %p127 = por %p125, %p126
      %p128 = scmp.ne.s32.totalorder %s116, %s117
      %p129 = scmp.eq.s32.totalorder %s23, 2
      %p130 = por %p128, %p129
      %p132 = scmp.ne.s32.totalorder %s117, %s131
      %p133 = scmp.eq.s32.totalorder %s23, 0
      %p134 = por %p132, %p133
      %s136 = sadd.s32 %s135, 1
      %p139 = scmp.eq.s32.totalorder %s17, 2
      %p140 = scmp.ne.s32.totalorder %s135, %s137
      %p141 = scmp.eq.s32.totalorder %s17, 0
      %p142 = por %p140, %p141
      %p143 = scmp.ne.s32.totalorder %s135, %s137
      %p144 = scmp.eq.s32.totalorder %s22, 2
      %p145 = por %p143, %p144
      %p146 = scmp.ne.s32.totalorder %s137, %s138
      %p147 = scmp.eq.s32.totalorder %s22, 0
      %p148 = por %p146, %p147
      %p149 = scmp.ne.s32.totalorder %s137, %s138
      %p150 = scmp.eq.s32.totalorder %s23, 2
      %p151 = por %p149, %p150
      %p153 = scmp.ne.s32.totalorder %s138, %s152
      %p154 = scmp.eq.s32.totalorder %s23, 0
      %p155 = por %p153, %p154
      %s157 = sadd.s32 %s156, 1
      %p160 = scmp.eq.s32.totalorder %s17, 2
      %p161 = scmp.ne.s32.totalorder %s156, %s158
      %p162 = scmp.eq.s32.totalorder %s17, 0
      %p163 = por %p161, %p162
      %p164 = scmp.ne.s32.totalorder %s156, %s158
      %p165 = scmp.eq.s32.totalorder %s22, 2
      %p166 = por %p164, %p165
      %p167 = scmp.ne.s32.totalorder %s158, %s159
      %p168 = scmp.eq.s32.totalorder %s22, 0
      %p169 = por %p167, %p168
      %p170 = scmp.ne.s32.totalorder %s158, %s159
      %p171 = scmp.eq.s32.totalorder %s23, 2
      %p172 = por %p170, %p171
      %p174 = scmp.ne.s32.totalorder %s159, %s173
      %p175 = scmp.eq.s32.totalorder %s23, 0
      %p176 = por %p174, %p175
      %s178 = sadd.s32 %s177, 1
      %p181 = scmp.eq.s32.totalorder %s17, 2
      %p182 = scmp.ne.s32.totalorder %s177, %s179
      %p183 = scmp.eq.s32.totalorder %s17, 0
      %p184 = por %p182, %p183
      %p185 = scmp.ne.s32.totalorder %s177, %s179
      %p186 = scmp.eq.s32.totalorder %s22, 2
      %p187 = por %p185, %p186
      %p188 = scmp.ne.s32.totalorder %s179, %s180
      %p189 = scmp.eq.s32.totalorder %s22, 0
      %p190 = por %p188, %p189
      %p191 = scmp.ne.s32.totalorder %s179, %s180
      %p192 = scmp.eq.s32.totalorder %s23, 2
      %p193 = por %p191, %p192
      %p195 = scmp.ne.s32.totalorder %s180, %s194
      %p196 = scmp.eq.s32.totalorder %s23, 0
      %p197 = por %p195, %p196
      %s199 = sadd.s32 %s198, 1
      %p202 = scmp.eq.s32.totalorder %s17, 2
      %p203 = scmp.ne.s32.totalorder %s198, %s200
      %p204 = scmp.eq.s32.totalorder %s17, 0
      %p205 = por %p203, %p204
      %p206 = scmp.ne.s32.totalorder %s198, %s200
      %p207 = scmp.eq.s32.totalorder %s22, 2
      %p208 = por %p206, %p207
      %p209 = scmp.ne.s32.totalorder %s200, %s201
      %p210 = scmp.eq.s32.totalorder %s22, 0
      %p211 = por %p209, %p210
      %p212 = scmp.ne.s32.totalorder %s200, %s201
      %p213 = scmp.eq.s32.totalorder %s23, 2
      %p214 = por %p212, %p213
      %p216 = scmp.ne.s32.totalorder %s201, %s215
      %p217 = scmp.eq.s32.totalorder %s23, 0
      %p218 = por %p216, %p217
      %s219 = ssub.s32 %s17, %s24
      %p220 = scmp.eq.s32.totalorder %s219, 0
      %s222 = sadd.s32 %s221, 1
      %s223 = scalar_select %p220, %s221, %s222
      %p226 = pneg %p220
      %p227 = scmp.eq.s32.totalorder %s17, 2
      %p228 = por %p226, %p227
      %p229 = scmp.ne.s32.totalorder %s221, %s224
      %p230 = scmp.eq.s32.totalorder %s17, 0
      %p231 = por %p229, %p230
      %p232 = scmp.ne.s32.totalorder %s221, %s224
      %p233 = scmp.eq.s32.totalorder %s22, 2
      %p234 = por %p232, %p233
      %p235 = scmp.ne.s32.totalorder %s224, %s225
      %p236 = scmp.eq.s32.totalorder %s22, 0
      %p237 = por %p235, %p236
      %p238 = scmp.ne.s32.totalorder %s224, %s225
      %p239 = scmp.eq.s32.totalorder %s23, 2
      %p240 = por %p238, %p239
      %p242 = scmp.ne.s32.totalorder %s225, %s241
      %p243 = scmp.eq.s32.totalorder %s23, 0
      %p244 = por %p242, %p243
      %p245 = scmp.le.s32.totalorder 1, %s17
      %p246 = scmp.lt.s32.totalorder %s17, 4
      %p247 = pnand %p245, %p246
      %p248 = pneg %p247
      // Predicated region
      $region9: #{mlp_regression_forward.1} parent=5 // pred_check
        _
      $region10: #{mlp_regression_forward.1} parent=5 // pred_check_branch
        %250 = sbr.rel (%p247) target = $region12
      $region11: #{mlp_regression_forward.1} parent=5 // pred_region
        %s251 = ssub.s32 %s17, 1
        // Predicated region
        $region13: #{mlp_regression_forward.1} parent=11 // pred_check
          %p252 = pneg %p64
        $region14: #{mlp_regression_forward.1} parent=11 // pred_check_branch
          %254 = sbr.rel (%p252) target = $region16
        $region15: #{mlp_regression_forward.1} parent=11 // pred_region
          _
        $region16: #{mlp_regression_forward.1} parent=11 // pred_fallthru
          _
        // Predicated region
        $region17: #{mlp_regression_forward.1} parent=11 // pred_check
          %p255 = pneg %p85
        $region18: #{mlp_regression_forward.1} parent=11 // pred_check_branch
          %257 = sbr.rel (%p255) target = $region20
        $region19: #{mlp_regression_forward.1} parent=11 // pred_region
          _
        $region20: #{mlp_regression_forward.1} parent=11 // pred_fallthru
          _
        // Predicated region
        $region21: #{mlp_regression_forward.1} parent=11 // pred_check
          %p258 = pneg %p106
        $region22: #{mlp_regression_forward.1} parent=11 // pred_check_branch
          %260 = sbr.rel (%p258) target = $region24
        $region23: #{mlp_regression_forward.1} parent=11 // pred_region
          %s262 = ssub.s32 1024, 1024
          %263 = vsyncadd [#allocation3], %s262
          %s264 = sshll.u32 [#allocation2], 4
          %s265 = int_to_ptr.vmem [resolvable:$true] %s264
          %270 = dma.hbm_to_vmem [thread:$0]  %s3, 1024, %s265, [#allocation3], 64, 64, 4
        $region24: #{mlp_regression_forward.1} parent=11 // pred_fallthru
          _
        // Predicated region
        $region25: #{mlp_regression_forward.1} parent=11 // pred_check
          %p271 = pneg %p127
        $region26: #{mlp_regression_forward.1} parent=11 // pred_check_branch
          %273 = sbr.rel (%p271) target = $region28
        $region27: #{mlp_regression_forward.1} parent=11 // pred_region
          _
        $region28: #{mlp_regression_forward.1} parent=11 // pred_fallthru
          _
        // Predicated region
        $region29: #{mlp_regression_forward.1} parent=11 // pred_check
          %p274 = pneg %p148
        $region30: #{mlp_regression_forward.1} parent=11 // pred_check_branch
          %276 = sbr.rel (%p274) target = $region32
        $region31: #{mlp_regression_forward.1} parent=11 // pred_region
          %s278 = ssub.s32 1024, 1024
          %279 = vsyncadd [#allocation5], %s278
          %s280 = sshll.u32 [#allocation4], 4
          %s281 = int_to_ptr.vmem [resolvable:$true] %s280
          %286 = dma.hbm_to_vmem [thread:$0]  %s5, 1024, %s281, [#allocation5], 64, 64, 4
        $region32: #{mlp_regression_forward.1} parent=11 // pred_fallthru
          _
        // Predicated region
        $region33: #{mlp_regression_forward.1} parent=11 // pred_check
          %p287 = pneg %p169
        $region34: #{mlp_regression_forward.1} parent=11 // pred_check_branch
          %289 = sbr.rel (%p287) target = $region36
        $region35: #{mlp_regression_forward.1} parent=11 // pred_region
          _
        $region36: #{mlp_regression_forward.1} parent=11 // pred_fallthru
          _
        // Predicated region
        $region37: #{mlp_regression_forward.1} parent=11 // pred_check
          %p290 = pneg %p190
        $region38: #{mlp_regression_forward.1} parent=11 // pred_check_branch
          %292 = sbr.rel (%p290) target = $region40
        $region39: #{mlp_regression_forward.1} parent=11 // pred_region
          %s294 = ssub.s32 1024, 1024
          %295 = vsyncadd [#allocation5], %s294
          %s296 = sshll.u32 [#allocation6], 4
          %s297 = int_to_ptr.vmem [resolvable:$true] %s296
          %302 = dma.hbm_to_vmem [thread:$0]  %s7, 1024, %s297, [#allocation5], 64, 64, 4
        $region40: #{mlp_regression_forward.1} parent=11 // pred_fallthru
          _
        // Predicated region
        $region41: #{mlp_regression_forward.1} parent=11 // pred_check
          %p303 = pneg %p211
        $region42: #{mlp_regression_forward.1} parent=11 // pred_check_branch
          %305 = sbr.rel (%p303) target = $region44
        $region43: #{mlp_regression_forward.1} parent=11 // pred_region
          _
        $region44: #{mlp_regression_forward.1} parent=11 // pred_fallthru
          _
      $region12: #{mlp_regression_forward.1} parent=5 // pred_fallthru
        _
      %p306 = scmp.lt.s32.totalorder %s17, 3
      // Predicated region
      $region45: #{mlp_regression_forward.1} parent=5 // pred_check
        %p307 = pneg %p306
      $region46: #{mlp_regression_forward.1} parent=5 // pred_check_branch
        %309 = sbr.rel (%p307) target = $region48
      $region47: #{mlp_regression_forward.1} parent=5 // pred_region
        // Predicated region
        $region49: #{mlp_regression_forward.1} parent=47 // pred_check
          %p310 = pneg %p37
        $region50: #{mlp_regression_forward.1} parent=47 // pred_check_branch
          %312 = sbr.rel (%p310) target = $region52
        $region51: #{mlp_regression_forward.1} parent=47 // pred_region
          %s313 = smul.u32 2, %s17
          %p314 = scmp.lt.s32.totalorder %s313, 5
          %s315 = scalar_select %p314, %s313, 5
          %s316 = smul.addr %s315, 4
          %s317 = scalar_lea.vmem %s0, %s316
          %s318 = smul.u32 2, %s17
        $region52: #{mlp_regression_forward.1} parent=47 // pred_fallthru
          _
      $region48: #{mlp_regression_forward.1} parent=5 // pred_fallthru
        _
      %p319 = scmp.le.s32.totalorder 1, %s17
      %p320 = scmp.lt.s32.totalorder %s17, 4
      %p321 = pnand %p319, %p320
      %p322 = pneg %p321
      // Predicated region
      $region53: #{mlp_regression_forward.1} parent=5 // pred_check
        _
      $region54: #{mlp_regression_forward.1} parent=5 // pred_check_branch
        %324 = sbr.rel (%p321) target = $region56
      $region55: #{mlp_regression_forward.1} parent=5 // pred_region
        %s325 = ssub.s32 %s17, 1
        // Predicated region
        $region57: #{mlp_regression_forward.1} parent=55 // pred_check
          %p326 = pneg %p106
        $region58: #{mlp_regression_forward.1} parent=55 // pred_check_branch
          %328 = sbr.rel (%p326) target = $region60
        $region59: #{mlp_regression_forward.1} parent=55 // pred_region
          %329 = dma.done [#allocation3], 1024
        $region60: #{mlp_regression_forward.1} parent=55 // pred_fallthru
          _
        // Predicated region
        $region61: #{mlp_regression_forward.1} parent=55 // pred_check
          %p330 = pneg %p148
        $region62: #{mlp_regression_forward.1} parent=55 // pred_check_branch
          %332 = sbr.rel (%p330) target = $region64
        $region63: #{mlp_regression_forward.1} parent=55 // pred_region
          %333 = dma.done [#allocation5], 1024
        $region64: #{mlp_regression_forward.1} parent=55 // pred_fallthru
          _
        // Predicated region
        $region65: #{mlp_regression_forward.1} parent=55 // pred_check
          %p334 = pneg %p190
        $region66: #{mlp_regression_forward.1} parent=55 // pred_check_branch
          %336 = sbr.rel (%p334) target = $region68
        $region67: #{mlp_regression_forward.1} parent=55 // pred_region
          %337 = dma.done [#allocation5], 1024
        $region68: #{mlp_regression_forward.1} parent=55 // pred_fallthru
          _
        %s338 = smul.u32 2, %s22
        %p339 = scmp.lt.s32.totalorder %s338, 5
        %s340 = scalar_select %p339, %s338, 5
        %s341 = smul.addr %s340, 4
        %s342 = scalar_lea.vmem %s0, %s341
        %p343 = pneg %p43
        %p344 = pneg %p40
        %p345 = pneg %p64
        %p346 = pneg %p61
        %p347 = pneg %p85
        %p348 = pneg %p82
        %p349 = pneg %p106
        %p350 = pneg %p103
        %p351 = pneg %p127
        %p352 = pneg %p124
        %p353 = pneg %p148
        %p354 = pneg %p145
        %p355 = pneg %p169
        %p356 = pneg %p166
        %p357 = pneg %p190
        %p358 = pneg %p187
        %p359 = pneg %p211
        %p360 = pneg %p208
        %p361 = pneg %p237
        %p362 = pneg %p234
        %s363 = smul.u32 2, %s22
        %p364 = scmp.lt.s32.totalorder %s363, 5
        %s365 = scalar_select %p364, %s363, 5
        %s366 = smul.addr %s365, 8
        %s367 = scalar_lea.vmem %s9, %s366
        %s368 = smul.u32 2, %s22
        %p369 = scmp.lt.s32.totalorder %s368, 5
        %s370 = scalar_select %p369, %s368, 5
        %s371 = smul.addr %s370, 4
        %s372 = scalar_lea.vmem %s0, %s371
        %s373 = smul.u32 2, %s22
        %s374 = smul.u32 2, %s22
        %p375 = scmp.lt.s32.totalorder %s374, 5
        %s376 = scalar_select %p375, %s374, 5
        %s377 = smul.addr %s376, 8
        %s378 = scalar_lea.vmem %s9, %s377
        %s379 = smul.u32 2, %s22
        %v381 = vld [vmem:[%s372] sm:$0xf]
        %v382 = vld [vmem:[%s372 + $0x4] sm:$0xf]
        %v383 = vld [vmem:[%s1] sm:$0xf]
        %v384 = vld [vmem:[%s1 + $0x4] sm:$0xf]
        %v385 = vld [vmem:[%s1 + $0x8] sm:$0xf]
        %v386 = vld [vmem:[%s1 + $0xc] sm:$0xf]
        %v387 = vld [vmem:[%s1 + $0x10] sm:$0xf]
        %v388 = vld [vmem:[%s1 + $0x14] sm:$0xf]
        %v389 = vld [vmem:[%s1 + $0x18] sm:$0xf]
        %v390 = vld [vmem:[%s1 + $0x1c] sm:$0xf]
        %v391 = vld [vmem:[%s1 + $0x20] sm:$0xf]
        %v392 = vld [vmem:[%s1 + $0x24] sm:$0xf]
        %v393 = vld [vmem:[%s1 + $0x28] sm:$0xf]
        %v394 = vld [vmem:[%s1 + $0x2c] sm:$0xf]
        %v395 = vld [vmem:[%s1 + $0x30] sm:$0xf]
        %v396 = vld [vmem:[%s1 + $0x34] sm:$0xf]
        %v397 = vld [vmem:[%s1 + $0x38] sm:$0xf]
        %v398 = vld [vmem:[%s1 + $0x3c] sm:$0xf]
        %v399 = vld [vmem:[%s2] sm:$0x1]
        %v401 = vlaneseq
        %v402 = vshrl.u32 %v401, 7
        %v403 = vsub.s32 0, %v402
        %v404 = vrot.slane %v399, %v403
        %v408 = vunpack.c.l.b16 %v381
        %v409 = vunpack.c.l.b16 %v382
        %v410 = vpack.c.b16 %v409, %v408
        %v428 = vunpack.c.l.b16 %v383
        %v429 = vunpack.c.l.b16 %v384
        %v430 = vunpack.c.l.b16 %v385
        %v431 = vunpack.c.l.b16 %v386
        %v432 = vunpack.c.l.b16 %v387
        %v433 = vunpack.c.l.b16 %v388
        %v434 = vunpack.c.l.b16 %v389
        %v435 = vunpack.c.l.b16 %v390
        %v436 = vunpack.c.l.b16 %v391
        %v437 = vunpack.c.l.b16 %v392
        %v438 = vunpack.c.l.b16 %v393
        %v439 = vunpack.c.l.b16 %v394
        %v440 = vunpack.c.l.b16 %v395
        %v441 = vunpack.c.l.b16 %v396
        %v442 = vunpack.c.l.b16 %v397
        %v443 = vunpack.c.l.b16 %v398
        %v444 = vpack.c.b16 %v429, %v428
        %v445 = vpack.c.b16 %v431, %v430
        %v446 = vpack.c.b16 %v433, %v432
        %v447 = vpack.c.b16 %v435, %v434
        %v448 = vpack.c.b16 %v437, %v436
        %v449 = vpack.c.b16 %v439, %v438
        %v450 = vpack.c.b16 %v441, %v440
        %v451 = vpack.c.b16 %v443, %v442
        %460 = vmatprep.subr.bf16.mxu0 0
        %461 = vmatpush1.bf16.msra.mxu0 %v444
        %462 = vmatprep.subr.bf16.mxu0 0
        %463 = vmatpush1.bf16.msra.mxu0 %v445
        %464 = vmatprep.subr.bf16.mxu0 0
        %465 = vmatpush1.bf16.msra.mxu0 %v446
        %466 = vmatprep.subr.bf16.mxu0 0
        %467 = vmatpush1.bf16.msra.mxu0 %v447
        %468 = vmatprep.subr.bf16.mxu0 0
        %469 = vmatpush1.bf16.msra.mxu0 %v448
        %470 = vmatprep.subr.bf16.mxu0 0
        %471 = vmatpush1.bf16.msra.mxu0 %v449
        %472 = vmatprep.subr.bf16.mxu0 0
        %473 = vmatpush1.bf16.msra.mxu0 %v450
        %474 = vmatprep.subr.bf16.mxu0 0
        %475 = vmatpush1.bf16.msra.mxu0 %v451
        %476 = vmatprep.subr.bf16.mxu0 0
        %477 = vmatpush1.bf16.msra.mxu0 0
        %478 = vmatprep.subr.bf16.mxu0 0
        %479 = vmatpush1.bf16.msra.mxu0 0
        %480 = vmatprep.subr.bf16.mxu0 0
        %481 = vmatpush1.bf16.msra.mxu0 0
        %482 = vmatprep.subr.bf16.mxu0 0
        %483 = vmatpush1.bf16.msra.mxu0 0
        %484 = vmatprep.subr.bf16.mxu0 0
        %485 = vmatpush1.bf16.msra.mxu0 0
        %486 = vmatprep.subr.bf16.mxu0 0
        %487 = vmatpush1.bf16.msra.mxu0 0
        %488 = vmatprep.subr.bf16.mxu0 0
        %489 = vmatpush1.bf16.msra.mxu0 0
        %490 = vmatprep.subr.bf16.mxu0 0
        %491 = vmatpush1.bf16.msra.mxu0 0
        %492 = vmatprep.mubr.bf16.mxu0 0
        %493 = vmatmul.mubr.bf16.gmra.mrb[0].mxu0 %v410
        %v494 = vpop.f32.mrb[0].mxu0
        %v495 = vadd.f32 %v404, %v494
        %v496 = vpop.f32.mrb[0].mxu0
        %v497 = vpop.f32.mrb[0].mxu0
        %v498 = vadd.f32 %v404, %v497
        %v499 = vpop.f32.mrb[0].mxu0
        %500 = vdwg.mxu0
        %v501 = vtanh.pop %v495
        %v502 = vtanh.pop %v498
        %v503 = vpack.c.bf16 %v502, %v501
        %v504 = vld [vmem:[#allocation2] sm:$0xf]
        %v505 = vld [vmem:[#allocation2 + $0x4] sm:$0xf]
        %v506 = vld [vmem:[#allocation2 + $0x8] sm:$0xf]
        %v507 = vld [vmem:[#allocation2 + $0xc] sm:$0xf]
        %v508 = vld [vmem:[#allocation2 + $0x10] sm:$0xf]
        %v509 = vld [vmem:[#allocation2 + $0x14] sm:$0xf]
        %v510 = vld [vmem:[#allocation2 + $0x18] sm:$0xf]
        %v511 = vld [vmem:[#allocation2 + $0x1c] sm:$0xf]
        %v512 = vld [vmem:[#allocation2 + $0x20] sm:$0xf]
        %v513 = vld [vmem:[#allocation2 + $0x24] sm:$0xf]
        %v514 = vld [vmem:[#allocation2 + $0x28] sm:$0xf]
        %v515 = vld [vmem:[#allocation2 + $0x2c] sm:$0xf]
        %v516 = vld [vmem:[#allocation2 + $0x30] sm:$0xf]
        %v517 = vld [vmem:[#allocation2 + $0x34] sm:$0xf]
        %v518 = vld [vmem:[#allocation2 + $0x38] sm:$0xf]
        %v519 = vld [vmem:[#allocation2 + $0x3c] sm:$0xf]
        %v520 = vld [vmem:[%s4] sm:$0x1]
        %v522 = vlaneseq
        %v523 = vshrl.u32 %v522, 7
        %v524 = vsub.s32 0, %v523
        %v525 = vrot.slane %v520, %v524
        %v543 = vunpack.c.l.b16 %v504
        %v544 = vunpack.c.l.b16 %v505
        %v545 = vunpack.c.l.b16 %v506
        %v546 = vunpack.c.l.b16 %v507
        %v547 = vunpack.c.l.b16 %v508
        %v548 = vunpack.c.l.b16 %v509
        %v549 = vunpack.c.l.b16 %v510
        %v550 = vunpack.c.l.b16 %v511
        %v551 = vunpack.c.l.b16 %v512
        %v552 = vunpack.c.l.b16 %v513
        %v553 = vunpack.c.l.b16 %v514
        %v554 = vunpack.c.l.b16 %v515
        %v555 = vunpack.c.l.b16 %v516
        %v556 = vunpack.c.l.b16 %v517
        %v557 = vunpack.c.l.b16 %v518
        %v558 = vunpack.c.l.b16 %v519
        %v559 = vpack.c.b16 %v544, %v543
        %v560 = vpack.c.b16 %v546, %v545
        %v561 = vpack.c.b16 %v548, %v547
        %v562 = vpack.c.b16 %v550, %v549
        %v563 = vpack.c.b16 %v552, %v551
        %v564 = vpack.c.b16 %v554, %v553
        %v565 = vpack.c.b16 %v556, %v555
        %v566 = vpack.c.b16 %v558, %v557
        %575 = vmatprep.subr.bf16.mxu0 0
        %576 = vmatpush1.bf16.msra.mxu0 %v559
        %577 = vmatprep.subr.bf16.mxu0 0
        %578 = vmatpush1.bf16.msra.mxu0 %v560
        %579 = vmatprep.subr.bf16.mxu0 0
        %580 = vmatpush1.bf16.msra.mxu0 %v561
        %581 = vmatprep.subr.bf16.mxu0 0
        %582 = vmatpush1.bf16.msra.mxu0 %v562
        %583 = vmatprep.subr.bf16.mxu0 0
        %584 = vmatpush1.bf16.msra.mxu0 %v563
        %585 = vmatprep.subr.bf16.mxu0 0
        %586 = vmatpush1.bf16.msra.mxu0 %v564
        %587 = vmatprep.subr.bf16.mxu0 0
        %588 = vmatpush1.bf16.msra.mxu0 %v565
        %589 = vmatprep.subr.bf16.mxu0 0
        %590 = vmatpush1.bf16.msra.mxu0 %v566
        %591 = vmatprep.subr.bf16.mxu0 0
        %592 = vmatpush1.bf16.msra.mxu0 0
        %593 = vmatprep.subr.bf16.mxu0 0
        %594 = vmatpush1.bf16.msra.mxu0 0
        %595 = vmatprep.subr.bf16.mxu0 0
        %596 = vmatpush1.bf16.msra.mxu0 0
        %597 = vmatprep.subr.bf16.mxu0 0
        %598 = vmatpush1.bf16.msra.mxu0 0
        %599 = vmatprep.subr.bf16.mxu0 0
        %600 = vmatpush1.bf16.msra.mxu0 0
        %601 = vmatprep.subr.bf16.mxu0 0
        %602 = vmatpush1.bf16.msra.mxu0 0
        %603 = vmatprep.subr.bf16.mxu0 0
        %604 = vmatpush1.bf16.msra.mxu0 0
        %605 = vmatprep.subr.bf16.mxu0 0
        %606 = vmatpush1.bf16.msra.mxu0 0
        %607 = vmatprep.mubr.bf16.mxu0 0
        %608 = vmatmul.mubr.bf16.gmra.mrb[0].mxu0 %v503
        %v609 = vpop.f32.mrb[0].mxu0
        %v610 = vadd.f32 %v525, %v609
        %v611 = vpop.f32.mrb[0].mxu0
        %v612 = vpop.f32.mrb[0].mxu0
        %v613 = vadd.f32 %v525, %v612
        %v614 = vpop.f32.mrb[0].mxu0
        %615 = vdwg.mxu0
        %v616 = vtanh.pop %v610
        %v617 = vtanh.pop %v613
        %v618 = vpack.c.bf16 %v617, %v616
        %v619 = vld [vmem:[#allocation4] sm:$0xf]
        %v620 = vld [vmem:[#allocation4 + $0x4] sm:$0xf]
        %v621 = vld [vmem:[#allocation4 + $0x8] sm:$0xf]
        %v622 = vld [vmem:[#allocation4 + $0xc] sm:$0xf]
        %v623 = vld [vmem:[#allocation4 + $0x10] sm:$0xf]
        %v624 = vld [vmem:[#allocation4 + $0x14] sm:$0xf]
        %v625 = vld [vmem:[#allocation4 + $0x18] sm:$0xf]
        %v626 = vld [vmem:[#allocation4 + $0x1c] sm:$0xf]
        %v627 = vld [vmem:[#allocation4 + $0x20] sm:$0xf]
        %v628 = vld [vmem:[#allocation4 + $0x24] sm:$0xf]
        %v629 = vld [vmem:[#allocation4 + $0x28] sm:$0xf]
        %v630 = vld [vmem:[#allocation4 + $0x2c] sm:$0xf]
        %v631 = vld [vmem:[#allocation4 + $0x30] sm:$0xf]
        %v632 = vld [vmem:[#allocation4 + $0x34] sm:$0xf]
        %v633 = vld [vmem:[#allocation4 + $0x38] sm:$0xf]
        %v634 = vld [vmem:[#allocation4 + $0x3c] sm:$0xf]
        %v635 = vld [vmem:[%s6] sm:$0x1]
        %v637 = vlaneseq
        %v638 = vshrl.u32 %v637, 7
        %v639 = vsub.s32 0, %v638
        %v640 = vrot.slane %v635, %v639
        %v658 = vunpack.c.l.b16 %v619
        %v659 = vunpack.c.l.b16 %v620
        %v660 = vunpack.c.l.b16 %v621
        %v661 = vunpack.c.l.b16 %v622
        %v662 = vunpack.c.l.b16 %v623
        %v663 = vunpack.c.l.b16 %v624
        %v664 = vunpack.c.l.b16 %v625
        %v665 = vunpack.c.l.b16 %v626
        %v666 = vunpack.c.l.b16 %v627
        %v667 = vunpack.c.l.b16 %v628
        %v668 = vunpack.c.l.b16 %v629
        %v669 = vunpack.c.l.b16 %v630
        %v670 = vunpack.c.l.b16 %v631
        %v671 = vunpack.c.l.b16 %v632
        %v672 = vunpack.c.l.b16 %v633
        %v673 = vunpack.c.l.b16 %v634
        %v674 = vpack.c.b16 %v659, %v658
        %v675 = vpack.c.b16 %v661, %v660
        %v676 = vpack.c.b16 %v663, %v662
        %v677 = vpack.c.b16 %v665, %v664
        %v678 = vpack.c.b16 %v667, %v666
        %v679 = vpack.c.b16 %v669, %v668
        %v680 = vpack.c.b16 %v671, %v670
        %v681 = vpack.c.b16 %v673, %v672
        %690 = vmatprep.subr.bf16.mxu0 0
        %691 = vmatpush1.bf16.msra.mxu0 %v674
        %692 = vmatprep.subr.bf16.mxu0 0
        %693 = vmatpush1.bf16.msra.mxu0 %v675
        %694 = vmatprep.subr.bf16.mxu0 0
        %695 = vmatpush1.bf16.msra.mxu0 %v676
        %696 = vmatprep.subr.bf16.mxu0 0
        %697 = vmatpush1.bf16.msra.mxu0 %v677
        %698 = vmatprep.subr.bf16.mxu0 0
        %699 = vmatpush1.bf16.msra.mxu0 %v678
        %700 = vmatprep.subr.bf16.mxu0 0
        %701 = vmatpush1.bf16.msra.mxu0 %v679
        %702 = vmatprep.subr.bf16.mxu0 0
        %703 = vmatpush1.bf16.msra.mxu0 %v680
        %704 = vmatprep.subr.bf16.mxu0 0
        %705 = vmatpush1.bf16.msra.mxu0 %v681
        %706 = vmatprep.subr.bf16.mxu0 0
        %707 = vmatpush1.bf16.msra.mxu0 0
        %708 = vmatprep.subr.bf16.mxu0 0
        %709 = vmatpush1.bf16.msra.mxu0 0
        %710 = vmatprep.subr.bf16.mxu0 0
        %711 = vmatpush1.bf16.msra.mxu0 0
        %712 = vmatprep.subr.bf16.mxu0 0
        %713 = vmatpush1.bf16.msra.mxu0 0
        %714 = vmatprep.subr.bf16.mxu0 0
        %715 = vmatpush1.bf16.msra.mxu0 0
        %716 = vmatprep.subr.bf16.mxu0 0
        %717 = vmatpush1.bf16.msra.mxu0 0
        %718 = vmatprep.subr.bf16.mxu0 0
        %719 = vmatpush1.bf16.msra.mxu0 0
        %720 = vmatprep.subr.bf16.mxu0 0
        %721 = vmatpush1.bf16.msra.mxu0 0
        %722 = vmatprep.mubr.bf16.mxu0 0
        %723 = vmatmul.mubr.bf16.gmra.mrb[0].mxu0 %v618
        %v724 = vpop.f32.mrb[0].mxu0
        %v725 = vadd.f32 %v640, %v724
        %v726 = vpop.f32.mrb[0].mxu0
        %v727 = vpop.f32.mrb[0].mxu0
        %v728 = vadd.f32 %v640, %v727
        %v729 = vpop.f32.mrb[0].mxu0
        %730 = vdwg.mxu0
        %v731 = vtanh.pop %v725
        %v732 = vtanh.pop %v728
        %v733 = vpack.c.bf16 %v732, %v731
        %v734 = vld [vmem:[#allocation6] sm:$0xf]
        %v735 = vld [vmem:[#allocation6 + $0x4] sm:$0xf]
        %v736 = vld [vmem:[#allocation6 + $0x8] sm:$0xf]
        %v737 = vld [vmem:[#allocation6 + $0xc] sm:$0xf]
        %v738 = vld [vmem:[#allocation6 + $0x10] sm:$0xf]
        %v739 = vld [vmem:[#allocation6 + $0x14] sm:$0xf]
        %v740 = vld [vmem:[#allocation6 + $0x18] sm:$0xf]
        %v741 = vld [vmem:[#allocation6 + $0x1c] sm:$0xf]
        %v742 = vld [vmem:[#allocation6 + $0x20] sm:$0xf]
        %v743 = vld [vmem:[#allocation6 + $0x24] sm:$0xf]
        %v744 = vld [vmem:[#allocation6 + $0x28] sm:$0xf]
        %v745 = vld [vmem:[#allocation6 + $0x2c] sm:$0xf]
        %v746 = vld [vmem:[#allocation6 + $0x30] sm:$0xf]
        %v747 = vld [vmem:[#allocation6 + $0x34] sm:$0xf]
        %v748 = vld [vmem:[#allocation6 + $0x38] sm:$0xf]
        %v749 = vld [vmem:[#allocation6 + $0x3c] sm:$0xf]
        %v750 = vld [vmem:[%s8] sm:$0x1]
        %v752 = vlaneseq
        %v753 = vshrl.u32 %v752, 7
        %v754 = vsub.s32 0, %v753
        %v755 = vrot.slane %v750, %v754
        %v773 = vunpack.c.l.b16 %v734
        %v774 = vunpack.c.l.b16 %v735
        %v775 = vunpack.c.l.b16 %v736
        %v776 = vunpack.c.l.b16 %v737
        %v777 = vunpack.c.l.b16 %v738
        %v778 = vunpack.c.l.b16 %v739
        %v779 = vunpack.c.l.b16 %v740
        %v780 = vunpack.c.l.b16 %v741
        %v781 = vunpack.c.l.b16 %v742
        %v782 = vunpack.c.l.b16 %v743
        %v783 = vunpack.c.l.b16 %v744
        %v784 = vunpack.c.l.b16 %v745
        %v785 = vunpack.c.l.b16 %v746
        %v786 = vunpack.c.l.b16 %v747
        %v787 = vunpack.c.l.b16 %v748
        %v788 = vunpack.c.l.b16 %v749
        %v789 = vpack.c.b16 %v774, %v773
        %v790 = vpack.c.b16 %v776, %v775
        %v791 = vpack.c.b16 %v778, %v777
        %v792 = vpack.c.b16 %v780, %v779
        %v793 = vpack.c.b16 %v782, %v781
        %v794 = vpack.c.b16 %v784, %v783
        %v795 = vpack.c.b16 %v786, %v785
        %v796 = vpack.c.b16 %v788, %v787
        %805 = vmatprep.subr.bf16.mxu0 0
        %806 = vmatpush1.bf16.msra.mxu0 %v789
        %807 = vmatprep.subr.bf16.mxu0 0
        %808 = vmatpush1.bf16.msra.mxu0 %v790
        %809 = vmatprep.subr.bf16.mxu0 0
        %810 = vmatpush1.bf16.msra.mxu0 %v791
        %811 = vmatprep.subr.bf16.mxu0 0
        %812 = vmatpush1.bf16.msra.mxu0 %v792
        %813 = vmatprep.subr.bf16.mxu0 0
        %814 = vmatpush1.bf16.msra.mxu0 %v793
        %815 = vmatprep.subr.bf16.mxu0 0
        %816 = vmatpush1.bf16.msra.mxu0 %v794
        %817 = vmatprep.subr.bf16.mxu0 0
        %818 = vmatpush1.bf16.msra.mxu0 %v795
        %819 = vmatprep.subr.bf16.mxu0 0
        %820 = vmatpush1.bf16.msra.mxu0 %v796
        %821 = vmatprep.subr.bf16.mxu0 0
        %822 = vmatpush1.bf16.msra.mxu0 0
        %823 = vmatprep.subr.bf16.mxu0 0
        %824 = vmatpush1.bf16.msra.mxu0 0
        %825 = vmatprep.subr.bf16.mxu0 0
        %826 = vmatpush1.bf16.msra.mxu0 0
        %827 = vmatprep.subr.bf16.mxu0 0
        %828 = vmatpush1.bf16.msra.mxu0 0
        %829 = vmatprep.subr.bf16.mxu0 0
        %830 = vmatpush1.bf16.msra.mxu0 0
        %831 = vmatprep.subr.bf16.mxu0 0
        %832 = vmatpush1.bf16.msra.mxu0 0
        %833 = vmatprep.subr.bf16.mxu0 0
        %834 = vmatpush1.bf16.msra.mxu0 0
        %835 = vmatprep.subr.bf16.mxu0 0
        %836 = vmatpush1.bf16.msra.mxu0 0
        %837 = vmatprep.mubr.bf16.mxu0 0
        %838 = vmatmul.mubr.bf16.gmra.mrb[0].mxu0 %v733
        %v839 = vpop.f32.mrb[0].mxu0
        %v840 = vadd.f32 %v755, %v839
        %v841 = vpop.f32.mrb[0].mxu0
        %v842 = vpop.f32.mrb[0].mxu0
        %v843 = vadd.f32 %v755, %v842
        %v844 = vpop.f32.mrb[0].mxu0
        %845 = vdwg.mxu0
        %846 = vst [vmem:[%s378] sm:$0xff] %v840
        %847 = vst [vmem:[%s378 + $0x8] sm:$0xff] %v843
        %s848 = smul.u32 2, %s22
        %p849 = scmp.lt.s32.totalorder %s848, 5
        %s850 = scalar_select %p849, %s848, 5
        %s851 = smul.addr %s850, 8
        %s852 = scalar_lea.vmem %s9, %s851
        // Predicated region
        $region69: #{mlp_regression_forward.1} parent=55 // pred_check
          %p853 = pneg %p234
        $region70: #{mlp_regression_forward.1} parent=55 // pred_check_branch
          %855 = sbr.rel (%p853) target = $region72
        $region71: #{mlp_regression_forward.1} parent=55 // pred_region
          %s856 = smul.u32 2, %s22
        $region72: #{mlp_regression_forward.1} parent=55 // pred_fallthru
          _
      $region56: #{mlp_regression_forward.1} parent=5 // pred_fallthru
        _
      %p857 = scmp.le.s32.totalorder 2, %s17
      // Predicated region
      $region73: #{mlp_regression_forward.1} parent=5 // pred_check
        %p858 = pneg %p857
      $region74: #{mlp_regression_forward.1} parent=5 // pred_check_branch
        %860 = sbr.rel (%p858) target = $region76
      $region75: #{mlp_regression_forward.1} parent=5 // pred_region
        %s861 = ssub.s32 %s17, 2
        // Predicated region
        $region77: #{mlp_regression_forward.1} parent=75 // pred_check
          %p862 = pneg %p240
        $region78: #{mlp_regression_forward.1} parent=75 // pred_check_branch
          %864 = sbr.rel (%p862) target = $region80
        $region79: #{mlp_regression_forward.1} parent=75 // pred_region
          %s865 = smul.u32 2, %s23
          %p866 = scmp.lt.s32.totalorder %s865, 5
          %s867 = scalar_select %p866, %s865, 5
          %s868 = smul.addr %s867, 8
          %s869 = scalar_lea.vmem %s9, %s868
        $region80: #{mlp_regression_forward.1} parent=75 // pred_fallthru
          _
      $region76: #{mlp_regression_forward.1} parent=5 // pred_fallthru
        _
    $region6: #{mlp_regression_forward.1} parent=1 // loop_footer
      %s21 = sadd.s32 1, %s17
    $region7: #{mlp_regression_forward.1} parent=1 // loop_footer_branch
      %16 = sbr.rel target = $region3
    $region8: #{mlp_regression_forward.1} parent=1 // loop_exit
      _
    %870 = vsyncpa [#allocation3], 1
    %s871 = scalar_lea.sflag [#allocation3], 1
    %872 = vsyncpa %s871, 1
    %873 = vsyncpa [#allocation5], 1

</llo_original>
